<compile_context>
chip_gen: v6e
topology: v6e:2x2x1
jax: 0.10.0
libtpu: 0.0.40
codegen_flags: <defaults>
</compile_context>

<pallas_src>
import jax
import jax.numpy as jnp
from jax.experimental import pallas as pl
from jax.experimental.pallas import tpu as pltpu


def _gaussian_kernel_body(neg_inv_ref, xt_ref, y_ref, xn_ref, yn_ref, o_ref):
    # xt_ref: (tn, d) tile of X^T        (input dtype, e.g. f32 or bf16)
    # y_ref:  (d, tm) tile of Y
    # xn_ref: (tn, 1) precomputed ||X[:,i]||^2  (f32)
    # yn_ref: (1, tm) precomputed ||Y[:,j]||^2  (f32)
    # o_ref:  (tn, tm) f32 output tile
    xy = jnp.dot(xt_ref[...], y_ref[...],
                 preferred_element_type=jnp.float32)           # MXU, (tn, tm)
    d2 = xn_ref[...] + yn_ref[...] - 2.0 * xy
    # Matches torch: clamp_min(1e-30) on the squared distance (sqrt + re-square
    # in the reference is a no-op).
    d2 = jnp.maximum(d2, 1e-30)
    # exp(-d2 / (2*sigma2)) == exp(d2 * neg_inv), neg_inv precomputed in SMEM.
    o_ref[...] = jnp.exp(d2 * neg_inv_ref[0])


def _round_up(v, m):
    return ((v + m - 1) // m) * m


def gaussian_kernel(X, Y=None, sigma2=50.0, tn=None, tm=None):
    """X: (d, N), Y: (d, M) or None. Returns (N, M) float32 kernel matrix."""
    if Y is None:
        Y = X
    X = jnp.asarray(X)
    Y = jnp.asarray(Y)
    if X.ndim == 1:
        X = X[:, None]
    if Y.ndim == 1:
        Y = Y[:, None]
    d, N = X.shape
    d_y, M = Y.shape
    assert d == d_y, "feature dims must match"

    # Tile defaults: sublane-aligned rows, lane-dense cols; clamp to (padded)
    # extents for toy shapes so we never over-pad tiny problems.
    if tn is None:
        tn = min(256, _round_up(N, 8))
    if tm is None:
        tm = min(512, _round_up(M, 128))
    assert tn % 8 == 0, "tn must be a multiple of 8"
    assert tm % 128 == 0, "tm must be a multiple of 128"

    N_pad = _round_up(N, tn)
    M_pad = _round_up(M, tm)

    # Pre-transpose X outside the kernel -> canonical [tn, d] x [d, tm] MXU dot.
    Xt = X.T                                   # (N, d)
    if N_pad != N:
        Xt = jnp.pad(Xt, ((0, N_pad - N), (0, 0)))
    Yp = Y
    if M_pad != M:
        Yp = jnp.pad(Yp, ((0, 0), (0, M_pad - M)))

    # Column squared norms hoisted out of the kernel, in f32.
    xn = jnp.sum(Xt.astype(jnp.float32) ** 2, axis=1, keepdims=True)   # (N_pad, 1)
    yn = jnp.sum(Yp.astype(jnp.float32) ** 2, axis=0, keepdims=True)   # (1, M_pad)

    # Precomputed scalar: -1 / (2*sigma2), lands in SMEM via scalar prefetch.
    neg_inv = (-0.5 / jnp.asarray(sigma2, jnp.float32)).reshape((1,))

    grid = (N_pad // tn, M_pad // tm)

    # TODO(synk): very large feature dims d would need a third ("arbitrary")
    # grid axis over d-chunks with a VMEM f32 accumulator; full-d tiles are
    # kept here since typical d fits VMEM alongside the output tile.
    out = pl.pallas_call(
        _gaussian_kernel_body,
        out_shape=jax.ShapeDtypeStruct((N_pad, M_pad), jnp.float32),
        grid_spec=pltpu.PrefetchScalarGridSpec(
            num_scalar_prefetch=1,            # neg_inv -> SMEM
            grid=grid,
            in_specs=[
                pl.BlockSpec((tn, d), lambda i, j, s: (i, 0)),   # X^T tile
                pl.BlockSpec((d, tm), lambda i, j, s: (0, j)),   # Y tile
                pl.BlockSpec((tn, 1), lambda i, j, s: (i, 0)),   # x norms
                pl.BlockSpec((1, tm), lambda i, j, s: (0, j)),   # y norms
            ],
            out_specs=pl.BlockSpec((tn, tm), lambda i, j, s: (i, j)),
        ),
        compiler_params=pltpu.CompilerParams(
            dimension_semantics=("parallel", "parallel"),
            vmem_limit_bytes=64 * 1024 * 1024,
        ),
    )(neg_inv, Xt, Yp, xn, yn)

    if N_pad != N or M_pad != M:
        out = out[:N, :M]
    return out


def gaussian_kernel_ref(X, Y, sigma2):
    """Pure-JAX reference matching the torch semantics."""
    x1 = jnp.asarray(X, jnp.float32).T
    x2 = jnp.asarray(Y, jnp.float32).T
    x1n = jnp.sum(x1 * x1, axis=-1, keepdims=True)
    x2n = jnp.sum(x2 * x2, axis=-1, keepdims=True)
    res = x2n.T - 2.0 * (x1 @ x2.T) + x1n
    res = jnp.maximum(res, 1e-30)
    D = jnp.sqrt(res)
    return jnp.exp(-(D ** 2) / (2.0 * sigma2))


if __name__ == "__main__":
    key = jax.random.PRNGKey(0)
    k1, k2, k3, k4, k5, k6 = jax.random.split(key, 6)
    sigma2 = 50.0

    # Test 1: small aligned-ish shapes (d x N, d x M observation matrices).
    d, N, M = 32, 16, 8
    X = jax.random.normal(k1, (d, N), dtype=jnp.float32)
    Y = jax.random.normal(k2, (d, M), dtype=jnp.float32)
    K = jax.block_until_ready(gaussian_kernel(X, Y, sigma2=sigma2))
    K_ref = gaussian_kernel_ref(X, Y, sigma2)
    assert K.shape == (N, M)
    assert jnp.allclose(K, K_ref, atol=1e-5, rtol=1e-5), "mismatch (test 1)"

    # Test 2: Y=None path (kernel of X with itself).
    K_self = jax.block_until_ready(gaussian_kernel(X, None, sigma2=sigma2))
    K_self_ref = gaussian_kernel_ref(X, X, sigma2)
    assert jnp.allclose(K_self, K_self_ref, atol=1e-5, rtol=1e-5), "mismatch (test 2)"

    # Test 3: ragged shapes exercise the padding + slice path.
    d2_, N2, M2 = 7, 37, 21
    X2 = jax.random.normal(k3, (d2_, N2), dtype=jnp.float32)
    Y2 = jax.random.normal(k4, (d2_, M2), dtype=jnp.float32)
    K2 = jax.block_until_ready(gaussian_kernel(X2, Y2, sigma2=sigma2))
    K2_ref = gaussian_kernel_ref(X2, Y2, sigma2)
    assert K2.shape == (N2, M2)
    assert jnp.allclose(K2, K2_ref, atol=1e-5, rtol=1e-5), "mismatch (test 3)"

    # Test 4: explicit small tiles -> multi-step grid (3 x 2) path.
    d3, N3, M3 = 16, 48, 256
    X3 = jax.random.normal(k5, (d3, N3), dtype=jnp.float32)
    Y3 = jax.random.normal(k6, (d3, M3), dtype=jnp.float32)
    K3 = jax.block_until_ready(gaussian_kernel(X3, Y3, sigma2=sigma2, tn=16, tm=128))
    K3_ref = gaussian_kernel_ref(X3, Y3, sigma2)
    assert jnp.allclose(K3, K3_ref, atol=1e-5, rtol=1e-5), "mismatch (test 4)"

    print("KERNEL_OK")
</pallas_src>

<mosaic_0001>
module attributes {stable_mosaic.version = 11 : i64} {
  func.func @_gaussian_kernel_body(%arg0: i32, %arg1: i32, %arg2: memref<1xf32, #tpu.memory_space<smem>>, %arg3: memref<16x32xf32, #tpu.memory_space<vmem>>, %arg4: memref<32x128xf32, #tpu.memory_space<vmem>>, %arg5: memref<16x1xf32, #tpu.memory_space<vmem>>, %arg6: memref<1x128xf32, #tpu.memory_space<vmem>>, %arg7: memref<16x128xf32, #tpu.memory_space<vmem>>) attributes {dimension_semantics = [#tpu.dimension_semantics<parallel>, #tpu.dimension_semantics<parallel>], iteration_bounds = array<i64: 1, 1>, scalar_prefetch = 1 : i64, scratch_operands = 0 : i64, tpu.core_type = #tpu.core_type<tc>, window_params = [{transform_indices = @transform_0, window_bounds = array<i64: 16, 32>}, {transform_indices = @transform_1, window_bounds = array<i64: 32, 128>}, {transform_indices = @transform_2, window_bounds = array<i64: 16, 1>}, {transform_indices = @transform_3, window_bounds = array<i64: 1, 128>}, {transform_indices = @transform_4, window_bounds = array<i64: 16, 128>}]} {
    %c0 = arith.constant 0 : index
    %c0_0 = arith.constant 0 : index
    %0 = vector.load %arg3[%c0, %c0_0] : memref<16x32xf32, #tpu.memory_space<vmem>>, vector<16x32xf32>
    %c0_1 = arith.constant 0 : index
    %c0_2 = arith.constant 0 : index
    %1 = vector.load %arg4[%c0_1, %c0_2] : memref<32x128xf32, #tpu.memory_space<vmem>>, vector<32x128xf32>
    %cst = arith.constant dense<0.000000e+00> : vector<16x128xf32>
    %2 = tpu.matmul %0, %1, %cst {dimension_numbers = #tpu.dot_dimension_numbers<[1], [0], [0], [1], [0, 0, 1, 1], [], []>} : vector<16x32xf32>, vector<32x128xf32>, vector<16x128xf32> -> vector<16x128xf32>
    %c0_3 = arith.constant 0 : index
    %c0_4 = arith.constant 0 : index
    %3 = vector.load %arg5[%c0_3, %c0_4] : memref<16x1xf32, #tpu.memory_space<vmem>>, vector<16x1xf32>
    %c0_5 = arith.constant 0 : index
    %c0_6 = arith.constant 0 : index
    %4 = vector.load %arg6[%c0_5, %c0_6] : memref<1x128xf32, #tpu.memory_space<vmem>>, vector<1x128xf32>
    %5 = vector.broadcast %3 : vector<16x1xf32> to vector<16x128xf32>
    %6 = vector.broadcast %4 : vector<1x128xf32> to vector<16x128xf32>
    %7 = arith.addf %5, %6 : vector<16x128xf32>
    %cst_7 = arith.constant 2.000000e+00 : f32
    %8 = vector.broadcast %cst_7 : f32 to vector<16x128xf32>
    %9 = arith.mulf %8, %2 : vector<16x128xf32>
    %10 = arith.subf %7, %9 : vector<16x128xf32>
    %cst_8 = arith.constant 1.000000e-30 : f32
    %11 = vector.broadcast %cst_8 : f32 to vector<16x128xf32>
    %12 = arith.maximumf %10, %11 : vector<16x128xf32>
    %c0_9 = arith.constant 0 : index
    %13 = memref.load %arg2[%c0_9] : memref<1xf32, #tpu.memory_space<smem>>
    %14 = vector.broadcast %13 : f32 to vector<16x128xf32>
    %15 = arith.mulf %12, %14 : vector<16x128xf32>
    %16 = math.exp %15 : vector<16x128xf32>
    %c0_10 = arith.constant 0 : index
    %c0_11 = arith.constant 0 : index
    %17 = vector.load %arg7[%c0_10, %c0_11] : memref<16x128xf32, #tpu.memory_space<vmem>>, vector<16x128xf32>
    tpu.vector_store %arg7[%c0_10, %c0_11], %16 {strides = array<i32>} : memref<16x128xf32, #tpu.memory_space<vmem>>, vector<16x128xf32>,
    return
  }
  func.func @transform_0(%arg0: i32, %arg1: i32, %arg2: memref<1xf32, #tpu.memory_space<smem>>) -> (i32, i32) {
    %c0_i32 = arith.constant 0 : i32
    %c0_i32_0 = arith.constant 0 : i32
    return %arg0, %c0_i32 : i32, i32
  }
  func.func @transform_1(%arg0: i32, %arg1: i32, %arg2: memref<1xf32, #tpu.memory_space<smem>>) -> (i32, i32) {
    %c0_i32 = arith.constant 0 : i32
    %c0_i32_0 = arith.constant 0 : i32
    return %c0_i32, %arg1 : i32, i32
  }
  func.func @transform_2(%arg0: i32, %arg1: i32, %arg2: memref<1xf32, #tpu.memory_space<smem>>) -> (i32, i32) {
    %c0_i32 = arith.constant 0 : i32
    %c0_i32_0 = arith.constant 0 : i32
    return %arg0, %c0_i32 : i32, i32
  }
  func.func @transform_3(%arg0: i32, %arg1: i32, %arg2: memref<1xf32, #tpu.memory_space<smem>>) -> (i32, i32) {
    %c0_i32 = arith.constant 0 : i32
    %c0_i32_0 = arith.constant 0 : i32
    return %c0_i32, %arg1 : i32, i32
  }
  func.func @transform_4(%arg0: i32, %arg1: i32, %arg2: memref<1xf32, #tpu.memory_space<smem>>) -> (i32, i32) {
    %c0_i32 = arith.constant 0 : i32
    return %arg0, %arg1 : i32, i32
  }
}

</mosaic_0001>

<llo_original>
// kernel: tpu_custom_call.1
$region0: #{tpu_custom_call.1}
  #allocation0 [shape = 'u32[]', space=smem, size = 0x4, offset = 0x4, fixed_abs, tag = 'smem constant byte address 0x4 - core index']
  #allocation1 [shape = 'u32[144,128]{1,0:T(1,128)}', space=vmem, size = 0x12000, scoped, tag = 'internal scratch']
  #allocation2 [shape = 's32[1]{0}', space=sflag, size = 0x4, scoped, tag = 'scoped memory for tpu_custom_call.1']
  #allocation3 [shape = 'f32[1]{0:T(128)S(6)}', space=smem, size = 0x200, scoped, tag = 'prefetched SMEM operand 0']
  %s0 = inlined_call_operand.<no memory space> [shape: f32[1], index: 0, kind: input, shape index: {}]
  %s1 = inlined_call_operand.vmem [shape: f32[16,32], index: 1, kind: input, shape index: {}]
  %s2 = inlined_call_operand.hbm [shape: f32[32,128], index: 2, kind: input, shape index: {}]
  %s3 = inlined_call_operand.vmem [shape: f32[16,1], index: 3, kind: input, shape index: {}]
  %s4 = inlined_call_operand.vmem [shape: f32[1,128], index: 4, kind: input, shape index: {}]
  %s5 = inlined_call_operand.hbm [shape: f32[16,128], index: 5, kind: output, shape index: {}]
  %s6 = sld [smem:[#allocation0]]
  $region30: #{tpu_custom_call.1} parent=0
    _
  %s8 = ssub.s32 1, %s6
  %s9 = scalar_select 0, %s8, %s6
  %10 = sst [smem:[#allocation3]] %s0
  $region1: #{tpu_custom_call.1} parent=0
    #allocation4 [shape = 'u8[16384]{0}', space=vmem, size = 0x4000, scoped, tag = 'input window, operand 2, single buffered']
    #allocation5 [shape = 's32[1]{0}', space=sflag, size = 0x4, scoped, tag = 'scoped memory for tpu_custom_call.1']
    #allocation6 [shape = 's32[1]{0}', space=sflag, size = 0x4, scoped, tag = 'scoped memory for tpu_custom_call.1']
    #allocation7 [shape = 'u8[8192]{0}', space=vmem, size = 0x2000, scoped, tag = 'output window, operand 0, single buffered']
    %11 = vsyncpa [#allocation5], 0
    %12 = vsyncpa [#allocation6], 0
    // Predicated region
    $region2: #{tpu_custom_call.1} parent=1 // pred_check
      _
    $region3: #{tpu_custom_call.1} parent=1 // pred_check_branch
      %14 = sbr.rel (0) target = $region5
    $region4: #{tpu_custom_call.1} parent=1 // pred_region
      _
    $region5: #{tpu_custom_call.1} parent=1 // pred_fallthru
      _
    // Predicated region
    $region6: #{tpu_custom_call.1} parent=1 // pred_check
      _
    $region7: #{tpu_custom_call.1} parent=1 // pred_check_branch
      %16 = sbr.rel (0) target = $region9
    $region8: #{tpu_custom_call.1} parent=1 // pred_region
      %s18 = ssub.s32 512, 512
      %19 = vsyncadd [#allocation5], %s18
      %s20 = sshll.u32 [#allocation4], 4
      %s21 = int_to_ptr.vmem [resolvable:$true] %s20
      %26 = dma.hbm_to_vmem [thread:$0]  %s2, 512, %s21, [#allocation5], 128, 128, 8
    $region9: #{tpu_custom_call.1} parent=1 // pred_fallthru
      _
    // Predicated region
    $region10: #{tpu_custom_call.1} parent=1 // pred_check
      _
    $region11: #{tpu_custom_call.1} parent=1 // pred_check_branch
      %28 = sbr.rel (0) target = $region13
    $region12: #{tpu_custom_call.1} parent=1 // pred_region
      _
    $region13: #{tpu_custom_call.1} parent=1 // pred_fallthru
      _
    // Predicated region
    $region14: #{tpu_custom_call.1} parent=1 // pred_check
      _
    $region15: #{tpu_custom_call.1} parent=1 // pred_check_branch
      %30 = sbr.rel (0) target = $region17
    $region16: #{tpu_custom_call.1} parent=1 // pred_region
      _
    $region17: #{tpu_custom_call.1} parent=1 // pred_fallthru
      _
    // Predicated region
    $region18: #{tpu_custom_call.1} parent=1 // pred_check
      _
    $region19: #{tpu_custom_call.1} parent=1 // pred_check_branch
      %32 = sbr.rel (0) target = $region21
    $region20: #{tpu_custom_call.1} parent=1 // pred_region
      %33 = dma.done [#allocation5], 512
    $region21: #{tpu_custom_call.1} parent=1 // pred_fallthru
      _
    %v34 = vld [vmem:[%s1] sm:$0xff]
    %v35 = vld [vmem:[%s1 + $0x8] sm:$0xff]
    %v36 = vld [vmem:[#allocation4] sm:$0xff]
    %v37 = vld [vmem:[#allocation4 + $0x8] sm:$0xff]
    %v38 = vld [vmem:[#allocation4 + $0x10] sm:$0xff]
    %v39 = vld [vmem:[#allocation4 + $0x18] sm:$0xff]
    %vm40 = vcmask 261120
    %v42 = vsel %vm40, %v34, 0
    %v45 = vsel %vm40, %v35, 0
    %47 = vmatprep.subr.mxu0 0.0
    %48 = vmatpush1.msra.mxu0 0.0
    %49 = vmatprep.subr.mxu0 0.0
    %50 = vmatpush1.msra.mxu0 0.0
    %51 = vmatprep.subr.mxu0 0.0
    %52 = vmatpush1.msra.mxu0 0.0
    %53 = vmatprep.subr.mxu0 0.0
    %54 = vmatpush1.msra.mxu0 0.0
    %55 = vmatprep.subr.mxu0 0.0
    %56 = vmatpush1.msra.mxu0 0.0
    %57 = vmatprep.subr.mxu0 0.0
    %58 = vmatpush1.msra.mxu0 0.0
    %59 = vmatprep.subr.mxu0 0.0
    %60 = vmatpush1.msra.mxu0 0.0
    %61 = vmatprep.subr.mxu0 0.0
    %62 = vmatpush1.msra.mxu0 0.0
    %63 = vmatprep.subr.mxu0 0.0
    %64 = vmatpush1.msra.mxu0 0.0
    %65 = vmatprep.subr.mxu0 0.0
    %66 = vmatpush1.msra.mxu0 0.0
    %67 = vmatprep.subr.mxu0 0.0
    %68 = vmatpush1.msra.mxu0 0.0
    %69 = vmatprep.subr.mxu0 0.0
    %70 = vmatpush1.msra.mxu0 0.0
    %71 = vmatprep.subr.mxu0 0.0
    %72 = vmatpush1.msra.mxu0 %v39
    %73 = vmatprep.subr.mxu0 0.0
    %74 = vmatpush1.msra.mxu0 %v38
    %75 = vmatprep.subr.mxu0 0.0
    %76 = vmatpush1.msra.mxu0 %v37
    %77 = vmatprep.subr.mxu0 0.0
    %78 = vmatpush1.msra.mxu0 %v36
    %79 = vmatprep.subr.mxu0 0.0
    %80 = vmatpush2.msra.mxu0 0.0
    %81 = vmatprep.subr.mxu0 0.0
    %82 = vmatpush2.msra.mxu0 0.0
    %83 = vmatprep.subr.mxu0 0.0
    %84 = vmatpush2.msra.mxu0 0.0
    %85 = vmatprep.subr.mxu0 0.0
    %86 = vmatpush2.msra.mxu0 0.0
    %87 = vmatprep.subr.mxu0 0.0
    %88 = vmatpush2.msra.mxu0 0.0
    %89 = vmatprep.subr.mxu0 0.0
    %90 = vmatpush2.msra.mxu0 0.0
    %91 = vmatprep.subr.mxu0 0.0
    %92 = vmatpush2.msra.mxu0 0.0
    %93 = vmatprep.subr.mxu0 0.0
    %94 = vmatpush2.msra.mxu0 0.0
    %95 = vmatprep.subr.mxu0 0.0
    %96 = vmatpush2.msra.mxu0 0.0
    %97 = vmatprep.subr.mxu0 0.0
    %98 = vmatpush2.msra.mxu0 0.0
    %99 = vmatprep.subr.mxu0 0.0
    %100 = vmatpush2.msra.mxu0 0.0
    %101 = vmatprep.subr.mxu0 0.0
    %102 = vmatpush2.msra.mxu0 0.0
    %103 = vmatprep.subr.mxu0 0.0
    %104 = vmatpush2.msra.mxu0 0.0
    %105 = vmatprep.subr.mxu0 0.0
    %106 = vmatpush2.msra.mxu0 0.0
    %107 = vmatprep.subr.mxu0 0.0
    %108 = vmatpush2.msra.mxu0 0.0
    %109 = vmatprep.subr.mxu0 0.0
    %110 = vmatpush2.msra.mxu0 0.0
    %111 = vmatprep.mubr.f32.mxu0 0.0
    %112 = vmatmul.mubr.f32.gmra.mxu0 %v42
    %v113 = vpop.f32.mrf.mxu0
    %v114 = vadd.f32 0.0, %v113
    %v115 = vpop.f32.mrf.mxu0
    %116 = vmatprep.mubr.f32.mxu0 0.0
    %117 = vmatmul.mubr.f32.gmra.mxu0 %v45
    %v118 = vpop.f32.mrf.mxu0
    %v119 = vadd.f32 0.0, %v118
    %v120 = vpop.f32.mrf.mxu0
    %121 = vdwg.mxu0
    %v122 = vld [vmem:[%s3] sm:$0xff]
    %v123 = vld [vmem:[%s3 + $0x8] sm:$0xff]
    %v124 = vld [vmem:[%s4] sm:$0x1]
    %126 = vset.pattern.permute.xlu0 0
    %127 = vperm.xlu0 %126, %v122
    %v128 = vpop.permute.xlu0 %127
    %131 = vset.pattern.permute.xlu0 0
    %132 = vperm.xlu0 %131, %v123
    %v133 = vpop.permute.xlu0 %132
    %v136 = vlaneseq
    %v137 = vshrl.u32 %v136, 7
    %v138 = vsub.s32 0, %v137
    %v139 = vrot.slane %v124, %v138
    %v141 = vadd.f32 %v128, %v139
    %v142 = vadd.f32 %v133, %v139
    %v143 = vmul.f32 %v114, 2.0
    %v144 = vmul.f32 %v119, 2.0
    %v145 = vsub.f32 %v141, %v143
    %v146 = vsub.f32 %v142, %v144
    %v147 = vmax.f32 %v145, 1e-30
    %v148 = vmax.f32 %v146, 1e-30
    %s149 = sld [smem:[#allocation3]]
    %v150 = vstv %s149
    %v151 = vmul.f32 %v147, %v150
    %v152 = vmul.f32 %v148, %v150
    %v153 = vmul.f32 %v151, 1.442695
    %v154 = vpow.pop %v153
    %v155 = vmul.f32 %v152, 1.442695
    %v156 = vpow.pop %v155
    %157 = vst [vmem:[#allocation7] sm:$0xff] %v154
    %158 = vst [vmem:[#allocation7 + $0x8] sm:$0xff] %v156
    // Predicated region
    $region22: #{tpu_custom_call.1} parent=1 // pred_check
      _
    $region23: #{tpu_custom_call.1} parent=1 // pred_check_branch
      %160 = sbr.rel (0) target = $region25
    $region24: #{tpu_custom_call.1} parent=1 // pred_region
      %s162 = ssub.s32 256, 256
      %163 = vsyncadd [#allocation6], %s162
      %s164 = sshll.u32 [#allocation7], 4
      %s165 = int_to_ptr.vmem [resolvable:$true] %s164
      %170 = dma.vmem_to_hbm [thread:$0]  %s165, 256, %s5, [#allocation6], 128, 128, 8
    $region25: #{tpu_custom_call.1} parent=1 // pred_fallthru
      _
    // Predicated region
    $region26: #{tpu_custom_call.1} parent=1 // pred_check
      _
    $region27: #{tpu_custom_call.1} parent=1 // pred_check_branch
      %172 = sbr.rel (0) target = $region29
    $region28: #{tpu_custom_call.1} parent=1 // pred_region
      %173 = dma.done [#allocation6], 256
    $region29: #{tpu_custom_call.1} parent=1 // pred_fallthru
      _
    %174 = vsyncpa [#allocation5], 1
    %175 = vsyncpa [#allocation6], 1

</llo_original>
